<compile_context>
chip_gen: v7x
topology: tpu7x:2x2x1
jax: 0.10.0
libtpu: 0.0.40
codegen_flags: <defaults>
</compile_context>

<pallas_src>
import numpy as np
import jax
import jax.numpy as jnp
from jax.experimental import pallas as pl
from jax.experimental.pallas import tpu as pltpu

LANE = 128


# ---------------------------------------------------------------------------
# Icosahedron geometry + neighbor matrix (replicates the module's __init__)
# ---------------------------------------------------------------------------
def build_icosahedron():
    phi = (1.0 + 5.0 ** 0.5) / 2.0
    verts = np.array(
        [[-1.0, phi, 0.0], [1.0, phi, 0.0], [-1.0, -phi, 0.0], [1.0, -phi, 0.0],
         [0.0, -1.0, phi], [0.0, 1.0, phi], [0.0, -1.0, -phi], [0.0, 1.0, -phi],
         [phi, 0.0, -1.0], [phi, 0.0, 1.0], [-phi, 0.0, -1.0], [-phi, 0.0, 1.0]],
        dtype=np.float32)
    edges = []
    for i in range(len(verts)):
        for j in range(i + 1, len(verts)):
            d2 = float(np.sum((verts[i] - verts[j]) ** 2))
            if abs(d2 - 4.0) < 1e-4:  # edge length is 2 for this construction
                edges.append([i, j])
    return verts, edges


def get_neighbors(list_edges, nbr_vert):
    neighbors = [[] for _ in range(nbr_vert)]
    for v1, v2 in list_edges:
        neighbors[v1].append(v2)
        neighbors[v2].append(v1)
    return neighbors


def sort_neighbors(list_neighbors, nbr_vert):
    new_neighbors = [[] for _ in range(nbr_vert)]
    for i in range(nbr_vert):
        neighbors = list_neighbors[i].copy()
        vert = neighbors[0]
        new_neighbors[i].append(vert)
        neighbors.remove(vert)
        while len(neighbors) != 0:
            common = list(set(neighbors).intersection(list_neighbors[vert]))
            vert = common[0]
            new_neighbors[i].append(vert)
            neighbors.remove(vert)
    return new_neighbors


def sort_rotation(verts, list_neighbors, nbr_vert):
    new_neighbors = [[] for _ in range(nbr_vert)]
    for i in range(nbr_vert):
        p0 = verts[i]
        p1 = verts[list_neighbors[i][0]]
        p2 = verts[list_neighbors[i][1]]
        v1 = p1 - p0
        v2 = p2 - p1
        vn = np.cross(v1, v2)
        n = vn / np.linalg.norm(vn)
        milieu = p1 + v2 / 2
        v3 = milieu - p0
        cg = p0 + 2 * v3 / 3
        if float(np.dot(n, cg)) > 1:
            new_neighbors[i] = list_neighbors[i]
        else:
            list_neighbors[i].reverse()
            new_neighbors[i] = list_neighbors[i]
    return new_neighbors


def get_mat_neighbors(list_neighbors, nbr_vert):
    mat = np.zeros((nbr_vert, nbr_vert * 9), dtype=np.float32)
    for index_cam in range(nbr_vert):
        mat[index_cam][index_cam * 9] = 1.0
        for index_neighbor in range(len(list_neighbors[index_cam])):
            mat[list_neighbors[index_cam][index_neighbor]][
                index_cam * 9 + index_neighbor + 1] = 1.0
    return mat


# ---------------------------------------------------------------------------
# Literal (numpy) replica of IcosahedronConv2d.forward.  Used (a) at build
# time to fold everything into one constant operator and (b) in the test as
# the ground-truth reference.  Mirrors torch's views/permutes 1:1, including
# the V != F interleaving view after torch.mm.
# ---------------------------------------------------------------------------
def torch_sequence_reference_np(x, mat_neighbors, conv_w, conv_b):
    B, V, F = x.shape
    Cout = conv_w.shape[0]
    x2 = np.transpose(x, (0, 2, 1)).reshape(B * F, V)           # permute(0,2,1) + view
    g = x2 @ mat_neighbors                                      # torch.mm -> [B*F, V*9]
    t = g.reshape(B, V, F, 3, 3)                                # view [B, V, F, 3, 3]
    t = np.transpose(t, (0, 2, 1, 3, 4))                        # permute(0,2,1,3,4)
    patches = np.ascontiguousarray(t).reshape(B * V, F * 9)     # contiguous().view
    out = patches @ conv_w.reshape(Cout, F * 9).T + conv_b      # Conv2d 3x3 on 3x3 patch
    return out.reshape(B, V, Cout)


def build_fused_operator(mat_neighbors, conv_w, conv_b):
    """Fold (gather matrix + index shuffles + conv weight) into one constant
    [V*F, Npad] matrix and a [1, Npad] bias row (Npad = 192 rounded to 256)."""
    V = mat_neighbors.shape[0]
    Cout, F = conv_w.shape[0], conv_w.shape[1]
    # Identity batch: sample i = one-hot at flat position i of a [V, F] input.
    eye = np.eye(V * F, dtype=np.float32).reshape(V * F, V, F)
    zero_bias = np.zeros((Cout,), dtype=np.float32)
    w2 = torch_sequence_reference_np(eye, mat_neighbors, conv_w, zero_bias)
    w2 = w2.reshape(V * F, V * Cout)                            # out[b] = x[b].flat @ w2
    bias_flat = np.tile(conv_b.astype(np.float32), V)           # [V*Cout], col = v*Cout + c

    n_out = V * Cout
    n_pad = ((n_out + LANE - 1) // LANE) * LANE                 # 192 -> 256 (lane-dense store)
    w2_pad = np.zeros((V * F, n_pad), dtype=np.float32)
    w2_pad[:, :n_out] = w2
    b_pad = np.zeros((1, n_pad), dtype=np.float32)
    b_pad[0, :n_out] = bias_flat
    return w2_pad, b_pad


# ---------------------------------------------------------------------------
# Pallas kernel: the entire forward is one MXU matmul + bias.
# ---------------------------------------------------------------------------
def fused_icosa_conv_kernel(x_ref, w_ref, b_ref, o_ref):
    # [B, V*F] @ [V*F, Npad] + [1, Npad] -> [B, Npad]
    o_ref[...] = (
        jnp.dot(x_ref[...], w_ref[...], preferred_element_type=jnp.float32)
        + b_ref[...]
    )


def make_icosahedron_conv2d_forward(mat_neighbors, conv_w, conv_b):
    """Returns a jitted forward(x: [B, V, F]) -> [B, V, Cout]."""
    V = mat_neighbors.shape[0]
    Cout, F = conv_w.shape[0], conv_w.shape[1]
    n_out = V * Cout
    w2_pad_np, b_pad_np = build_fused_operator(mat_neighbors, conv_w, conv_b)
    w2_pad = jnp.asarray(w2_pad_np)      # [V*F, Npad] build-time constant
    b_pad = jnp.asarray(b_pad_np)        # [1, Npad]   build-time constant
    n_pad = w2_pad.shape[1]

    # Whole problem (<100 KiB) is a single block: no grid, full arrays in VMEM.
    vmem = pl.BlockSpec(memory_space=pltpu.MemorySpace.VMEM)

    @jax.jit
    def forward(x):
        B = x.shape[0]
        x_flat = x.reshape(B, V * F)     # contiguous: metadata-only under jit
        out_pad = pl.pallas_call(
            fused_icosa_conv_kernel,
            out_shape=jax.ShapeDtypeStruct((B, n_pad), jnp.float32),
            in_specs=[vmem, vmem, vmem],
            out_specs=vmem,
            # If B ever scales up: add grid=(pl.cdiv(B, tile_b),) over row
            # tiles with dimension_semantics=("parallel",) so v7x's 2 TCs
            # split the work, keep tiles well under the 32 MiB scoped VMEM,
            # and consider bf16 inputs (f32 accumulation) on v6e/v7x.
        )(x_flat, w2_pad, b_pad)
        return out_pad[:, :n_out].reshape(B, V, Cout)

    return forward


# ---------------------------------------------------------------------------
if __name__ == "__main__":
    # Geometry / neighbor matrix (deterministic, built in-script)
    verts_np, edges = build_icosahedron()
    nbr_vert = int(np.max(np.array(edges)) + 1)          # 12
    neigh = get_neighbors(edges, nbr_vert)
    neigh = sort_neighbors(neigh, nbr_vert)
    neigh = sort_rotation(verts_np, neigh, nbr_vert)
    mat_neighbors = get_mat_neighbors(neigh, nbr_vert)   # np [V, V*9]

    # Small shapes consistent with the module: batch=2, cams=12, features=8
    B, V, F, Cout = 2, nbr_vert, 8, 16
    key = jax.random.PRNGKey(0)
    kx, kw, kb = jax.random.split(key, 3)
    x = jax.random.normal(kx, (B, V, F), dtype=jnp.float32)
    conv_w = np.asarray(jax.random.normal(kw, (Cout, F, 3, 3), dtype=jnp.float32)) * 0.1
    conv_b = np.asarray(jax.random.normal(kb, (Cout,), dtype=jnp.float32)) * 0.1

    forward = make_icosahedron_conv2d_forward(mat_neighbors, conv_w, conv_b)
    out = jax.block_until_ready(forward(x))
    assert out.shape == (B, V, Cout)

    x_np = np.asarray(x)
    ref_np = torch_sequence_reference_np(x_np, mat_neighbors, conv_w, conv_b)

    # Check 1 (fold semantics, pure numpy, tight): the fused constant operator
    # reproduces the literal torch op sequence exactly.
    w2_pad_np, b_pad_np = build_fused_operator(mat_neighbors, conv_w, conv_b)
    fused_np = (x_np.reshape(B, V * F) @ w2_pad_np + b_pad_np)[:, :V * Cout]
    np.testing.assert_allclose(fused_np.reshape(B, V, Cout), ref_np,
                               rtol=1e-5, atol=1e-6)

    # Check 2 (kernel mechanics, tight): Pallas kernel == the same fused
    # matmul done by XLA on the TPU (identical operands -> same MXU regime).
    ref_fused_tpu = (
        jnp.dot(jnp.asarray(x_np.reshape(B, V * F)), jnp.asarray(w2_pad_np))
        + jnp.asarray(b_pad_np)
    )[:, :V * Cout].reshape(B, V, Cout)
    np.testing.assert_allclose(np.asarray(out), np.asarray(ref_fused_tpu),
                               rtol=1e-5, atol=1e-5)

    # Check 3 (end-to-end vs torch semantics): tolerance only loosened to
    # allow for the TPU MXU's reduced-precision f32 passes at default precision.
    np.testing.assert_allclose(np.asarray(out), ref_np, rtol=2e-2, atol=2e-2)

    print("KERNEL_OK")
</pallas_src>

<mosaic_0001>
module attributes {stable_mosaic.version = 11 : i64} {
  func.func @fused_icosa_conv_kernel(%arg0: memref<2x96xf32, #tpu.memory_space<vmem>>, %arg1: memref<96x256xf32, #tpu.memory_space<vmem>>, %arg2: memref<1x256xf32, #tpu.memory_space<vmem>>, %arg3: memref<2x256xf32, #tpu.memory_space<vmem>>) attributes {dimension_semantics = [], scalar_prefetch = 0 : i64, scratch_operands = 0 : i64, tpu.core_type = #tpu.core_type<tc>} {
    %c0 = arith.constant 0 : index
    %c0_0 = arith.constant 0 : index
    %0 = vector.load %arg0[%c0, %c0_0] : memref<2x96xf32, #tpu.memory_space<vmem>>, vector<2x96xf32>
    %c0_1 = arith.constant 0 : index
    %c0_2 = arith.constant 0 : index
    %1 = vector.load %arg1[%c0_1, %c0_2] : memref<96x256xf32, #tpu.memory_space<vmem>>, vector<96x256xf32>
    %cst = arith.constant dense<0.000000e+00> : vector<2x256xf32>
    %2 = tpu.matmul %0, %1, %cst {dimension_numbers = #tpu.dot_dimension_numbers<[1], [0], [0], [1], [0, 0, 1, 1], [], []>} : vector<2x96xf32>, vector<96x256xf32>, vector<2x256xf32> -> vector<2x256xf32>
    %c0_3 = arith.constant 0 : index
    %c0_4 = arith.constant 0 : index
    %3 = vector.load %arg2[%c0_3, %c0_4] : memref<1x256xf32, #tpu.memory_space<vmem>>, vector<1x256xf32>
    %4 = vector.broadcast %3 : vector<1x256xf32> to vector<2x256xf32>
    %5 = arith.addf %2, %4 : vector<2x256xf32>
    %c0_5 = arith.constant 0 : index
    %c0_6 = arith.constant 0 : index
    %6 = vector.load %arg3[%c0_5, %c0_6] : memref<2x256xf32, #tpu.memory_space<vmem>>, vector<2x256xf32>
    tpu.vector_store %arg3[%c0_5, %c0_6], %5 {strides = array<i32>} : memref<2x256xf32, #tpu.memory_space<vmem>>, vector<2x256xf32>,
    return
  }
}

</mosaic_0001>

<llo_original>
// kernel: forward.1
$region0: #{forward.1}
  #allocation0 [shape = 'u32[]', space=smem, size = 0x4, offset = 0x4, fixed_abs, tag = 'smem constant byte address 0x4 - core index']
  #allocation1 [shape = 'u32[144,128]{1,0:T(1,128)}', space=vmem, size = 0x12000, scoped, tag = 'internal scratch']
  %s0 = inlined_call_operand.vmem [shape: f32[2,96], index: 0, kind: input, shape index: {}]
  %s1 = inlined_call_operand.hbm [shape: f32[96,256], index: 1, kind: input, shape index: {}]
  %s2 = inlined_call_operand.vmem [shape: f32[1,256], index: 2, kind: input, shape index: {}]
  %s3 = inlined_call_operand.vmem [shape: f32[2,256], index: 3, kind: output, shape index: {}]
  %s4 = sld [smem:[#allocation0]]
  $region26: #{forward.1} parent=0
    _
  %s6 = ssub.s32 1, %s4
  %s7 = scalar_select 0, %s6, %s4
  $region1: #{forward.1} parent=0
    #allocation2 [shape = 'u8[98304]{0}', space=vmem, size = 0x18000, scoped, tag = 'input window, operand 1, single buffered']
    #allocation3 [shape = 's32[1]{0}', space=sflag, size = 0x4, scoped, tag = 'scoped memory for forward.1']
    %8 = vsyncpa [#allocation3], 0
    // Predicated region
    $region2: #{forward.1} parent=1 // pred_check
      _
    $region3: #{forward.1} parent=1 // pred_check_branch
      %10 = sbr.rel (0) target = $region5
    $region4: #{forward.1} parent=1 // pred_region
      _
    $region5: #{forward.1} parent=1 // pred_fallthru
      _
    // Predicated region
    $region6: #{forward.1} parent=1 // pred_check
      _
    $region7: #{forward.1} parent=1 // pred_check_branch
      %12 = sbr.rel (0) target = $region9
    $region8: #{forward.1} parent=1 // pred_region
      %s14 = ssub.s32 3072, 3072
      %15 = vsyncadd [#allocation3], %s14
      %s16 = sshll.u32 [#allocation2], 4
      %s17 = int_to_ptr.vmem [resolvable:$true] %s16
      %22 = dma.hbm_to_vmem [thread:$0]  %s1, 3072, %s17, [#allocation3], 256, 256, 16
    $region9: #{forward.1} parent=1 // pred_fallthru
      _
    // Predicated region
    $region10: #{forward.1} parent=1 // pred_check
      _
    $region11: #{forward.1} parent=1 // pred_check_branch
      %24 = sbr.rel (0) target = $region13
    $region12: #{forward.1} parent=1 // pred_region
      _
    $region13: #{forward.1} parent=1 // pred_fallthru
      _
    // Predicated region
    $region14: #{forward.1} parent=1 // pred_check
      _
    $region15: #{forward.1} parent=1 // pred_check_branch
      %26 = sbr.rel (0) target = $region17
    $region16: #{forward.1} parent=1 // pred_region
      %27 = dma.done [#allocation3], 3072
    $region17: #{forward.1} parent=1 // pred_fallthru
      _
    %v28 = vld [vmem:[%s0] sm:$0x3]
    %v29 = vld [vmem:[#allocation2] sm:$0xff]
    %v30 = vld [vmem:[#allocation2 + $0x8] sm:$0xff]
    %v31 = vld [vmem:[#allocation2 + $0x10] sm:$0xff]
    %v32 = vld [vmem:[#allocation2 + $0x18] sm:$0xff]
    %v33 = vld [vmem:[#allocation2 + $0x20] sm:$0xff]
    %v34 = vld [vmem:[#allocation2 + $0x28] sm:$0xff]
    %v35 = vld [vmem:[#allocation2 + $0x30] sm:$0xff]
    %v36 = vld [vmem:[#allocation2 + $0x38] sm:$0xff]
    %v37 = vld [vmem:[#allocation2 + $0x40] sm:$0xff]
    %v38 = vld [vmem:[#allocation2 + $0x48] sm:$0xff]
    %v39 = vld [vmem:[#allocation2 + $0x50] sm:$0xff]
    %v40 = vld [vmem:[#allocation2 + $0x58] sm:$0xff]
    %v41 = vld [vmem:[#allocation2 + $0x60] sm:$0xff]
    %v42 = vld [vmem:[#allocation2 + $0x68] sm:$0xff]
    %v43 = vld [vmem:[#allocation2 + $0x70] sm:$0xff]
    %v44 = vld [vmem:[#allocation2 + $0x78] sm:$0xff]
    %v45 = vld [vmem:[#allocation2 + $0x80] sm:$0xff]
    %v46 = vld [vmem:[#allocation2 + $0x88] sm:$0xff]
    %v47 = vld [vmem:[#allocation2 + $0x90] sm:$0xff]
    %v48 = vld [vmem:[#allocation2 + $0x98] sm:$0xff]
    %v49 = vld [vmem:[#allocation2 + $0xa0] sm:$0xff]
    %v50 = vld [vmem:[#allocation2 + $0xa8] sm:$0xff]
    %v51 = vld [vmem:[#allocation2 + $0xb0] sm:$0xff]
    %v52 = vld [vmem:[#allocation2 + $0xb8] sm:$0xff]
    %v53 = vld [vmem:[%s2] sm:$0x3]
    %v55 = vlaneseq
    %v56 = vshrl.u32 %v55, 7
    %v57 = vsub.s32 0, %v56
    %v58 = vrot.slane %v53, %v57
    %v59 = vlaneseq
    %v60 = vshrl.u32 %v59, 7
    %v61 = vsub.s32 1, %v60
    %v62 = vrot.slane %v53, %v61
    %vm65 = vcmask 785408
    %v67 = vsel %vm65, %v28, 0
    %69 = vmatprep.subr.mxu0 %v30
    %70 = vmatpush1.msra.mxu0 %v29
    %71 = vmatprep.subr.mxu0 %v32
    %72 = vmatpush1.msra.mxu0 %v31
    %73 = vmatprep.subr.mxu0 %v34
    %74 = vmatpush1.msra.mxu0 %v33
    %75 = vmatprep.subr.mxu0 %v36
    %76 = vmatpush1.msra.mxu0 %v35
    %77 = vmatprep.subr.mxu0 %v38
    %78 = vmatpush1.msra.mxu0 %v37
    %79 = vmatprep.subr.mxu0 %v40
    %80 = vmatpush1.msra.mxu0 %v39
    %81 = vmatprep.subr.mxu0 %v42
    %82 = vmatpush1.msra.mxu0 %v41
    %83 = vmatprep.subr.mxu0 %v44
    %84 = vmatpush1.msra.mxu0 %v43
    %85 = vmatprep.subr.mxu0 %v46
    %86 = vmatpush1.msra.mxu0 %v45
    %87 = vmatprep.subr.mxu0 %v48
    %88 = vmatpush1.msra.mxu0 %v47
    %89 = vmatprep.subr.mxu0 %v50
    %90 = vmatpush1.msra.mxu0 %v49
    %91 = vmatprep.subr.mxu0 %v52
    %92 = vmatpush1.msra.mxu0 %v51
    %93 = vmatprep.subr.mxu0 0.0
    %94 = vmatpush1.msra.mxu0 0.0
    %95 = vmatprep.subr.mxu0 0.0
    %96 = vmatpush1.msra.mxu0 0.0
    %97 = vmatprep.subr.mxu0 0.0
    %98 = vmatpush1.msra.mxu0 0.0
    %99 = vmatprep.subr.mxu0 0.0
    %100 = vmatpush1.msra.mxu0 0.0
    %101 = vmatprep.subr.mxu0 0.0
    %102 = vmatpush1.msra.mxu0 0.0
    %103 = vmatprep.subr.mxu0 0.0
    %104 = vmatpush1.msra.mxu0 0.0
    %105 = vmatprep.subr.mxu0 0.0
    %106 = vmatpush1.msra.mxu0 0.0
    %107 = vmatprep.subr.mxu0 0.0
    %108 = vmatpush1.msra.mxu0 0.0
    %109 = vmatprep.subr.mxu0 0.0
    %110 = vmatpush1.msra.mxu0 0.0
    %111 = vmatprep.subr.mxu0 0.0
    %112 = vmatpush1.msra.mxu0 0.0
    %113 = vmatprep.subr.mxu0 0.0
    %114 = vmatpush1.msra.mxu0 0.0
    %115 = vmatprep.subr.mxu0 0.0
    %116 = vmatpush1.msra.mxu0 0.0
    %117 = vmatprep.subr.mxu0 0.0
    %118 = vmatpush1.msra.mxu0 0.0
    %119 = vmatprep.subr.mxu0 0.0
    %120 = vmatpush1.msra.mxu0 0.0
    %121 = vmatprep.subr.mxu0 0.0
    %122 = vmatpush1.msra.mxu0 0.0
    %123 = vmatprep.subr.mxu0 0.0
    %124 = vmatpush1.msra.mxu0 0.0
    %125 = vmatprep.subr.mxu0 0.0
    %126 = vmatpush1.msra.mxu0 0.0
    %127 = vmatprep.subr.mxu0 0.0
    %128 = vmatpush1.msra.mxu0 0.0
    %129 = vmatprep.subr.mxu0 0.0
    %130 = vmatpush1.msra.mxu0 0.0
    %131 = vmatprep.subr.mxu0 0.0
    %132 = vmatpush1.msra.mxu0 0.0
    %133 = vmatprep.mubr.f32.mxu0 0.0
    %134 = vmatmul.mubr.f32.gmra.mrb[0].mxu0 %v67
    %v135 = vpop.f32.mrb[0].mxu0
    %v136 = vadd.f32 %v58, %v135
    %v137 = vpop.f32.mrb[0].mxu0
    %v138 = vadd.f32 %v62, %v137
    %139 = vdwg.mxu0
    %v142 = vcombine.low %v136, %v138
    %v144 = vunpack.c.l.s4 1983009808
    %v145 = vunpack.c.0.s8 %v144
    %v146 = vlaneseq
    %v147 = vshrl.u32 %v146, 7
    %v148 = vsub.s32 %v145, %v147
    %v149 = vrot.slane %v142, %v148
    %151 = vst [vmem:[%s3] sm:$0xf] %v149
    // Predicated region
    $region18: #{forward.1} parent=1 // pred_check
      _
    $region19: #{forward.1} parent=1 // pred_check_branch
      %153 = sbr.rel (0) target = $region21
    $region20: #{forward.1} parent=1 // pred_region
      _
    $region21: #{forward.1} parent=1 // pred_fallthru
      _
    // Predicated region
    $region22: #{forward.1} parent=1 // pred_check
      _
    $region23: #{forward.1} parent=1 // pred_check_branch
      %155 = sbr.rel (0) target = $region25
    $region24: #{forward.1} parent=1 // pred_region
      _
    $region25: #{forward.1} parent=1 // pred_fallthru
      _
    %156 = vsyncpa [#allocation3], 1

</llo_original>
